<compile_context>
chip_gen: v5e
topology: v5e:2x2
jax: 0.10.0
libtpu: 0.0.40
codegen_flags: <defaults>
</compile_context>

<pallas_src>
import math
import functools

import jax
import jax.numpy as jnp
from jax.experimental import pallas as pl
from jax.experimental.pallas import tpu as pltpu


def _round_up(x, m):
    return (x + m - 1) // m * m


def eqlr_matmul_kernel(scale_ref, x_ref, w_ref, b_ref, o_ref, *, compute_dtype):
    # scale_ref: SMEM (1,)  f32   -- equalized-LR wscale
    # x_ref    : VMEM (tm, tk)    -- x tile (f32 in HBM; optionally cast here)
    # w_ref    : VMEM (tk, tn)    -- W^T tile (already divided by wscale at init)
    # b_ref    : VMEM (1, tn)     -- bias tile
    # o_ref    : VMEM (tm, tn) f32 output tile, used directly as the accumulator
    #            (resident across the K grid axis — same block index for all k).
    k = pl.program_id(2)

    @pl.when(k == 0)
    def _():
        o_ref[...] = jnp.zeros_like(o_ref)

    x = x_ref[...]
    if compute_dtype is not None and x.dtype != compute_dtype:
        # In-kernel cast (VPU) — cheaper than a wrapper-level astype, which
        # would be a separate XLA pass over all of x in HBM.
        x = x.astype(compute_dtype)

    o_ref[...] += jnp.dot(x, w_ref[...], preferred_element_type=jnp.float32)

    @pl.when(k == pl.num_programs(2) - 1)
    def _():
        # Epilogue: y = s*(x @ W^T) + b  ==  (x*s) @ W^T + b.
        o_ref[...] = o_ref[...] * scale_ref[0] + b_ref[...]


def equalized_lr_linear(x, w_t, b, wscale, *,
                        tm_cap=512, tn_cap=512, tk_cap=1024,
                        weight_resident_bytes=6 * 1024 * 1024,
                        compute_dtype=None):
    """EqualizedLR forward: y = (x * wscale) @ W^T + b.

    x       : (B, T, F) float32
    w_t     : (F, O)    float32  -- W^T (weight already divided by wscale at init)
    b       : (O,)      float32
    wscale  : scalar
    compute_dtype: optionally feed the MXU in bf16 (v6e/v7x); accumulation
                   stays f32. Default None is f32 / torch-exact.
    """
    B, T, F = x.shape
    Fw, O = w_t.shape
    assert Fw == F, (Fw, F)
    M = B * T
    xf = x.reshape(M, F).astype(jnp.float32)

    w_dtype = jnp.dtype(compute_dtype) if compute_dtype is not None else jnp.dtype(jnp.float32)
    w_t = w_t.astype(w_dtype)                 # W is reused heavily -> pre-cast once
    x_isz = jnp.dtype(xf.dtype).itemsize
    w_isz = w_dtype.itemsize

    # ---- Tile selection --------------------------------------------------
    # Lane dims multiples of 128, sublane dim multiples of 8 (or == full dim).
    Op_full = _round_up(O, 128)
    Fp_full = _round_up(F, 128)

    if (Fp_full * Op_full * w_isz <= weight_resident_bytes
            and Op_full <= 2048 and Fp_full <= 2048):
        # Small-weight fast path (typical EqualizedLR layers): keep the whole
        # W^T + bias resident across all M tiles; grid collapses along N and K.
        tn, tk = Op_full, Fp_full
    else:
        tn = min(tn_cap, Op_full)
        tk = min(tk_cap, Fp_full)
    tm = min(tm_cap, _round_up(M, 8))

    Mp, Fp, Op = _round_up(M, tm), _round_up(F, tk), _round_up(O, tn)

    # Zero-pad to tile multiples (K-dim zeros contribute nothing; extra M/O
    # rows/cols are sliced off at the end).
    if (Mp, Fp) != (M, F):
        xf = jnp.pad(xf, ((0, Mp - M), (0, Fp - F)))
    if (Fp, Op) != (F, O):
        w_t = jnp.pad(w_t, ((0, Fp - F), (0, Op - O)))
    b2 = b.reshape(1, O).astype(jnp.float32)
    if Op != O:
        b2 = jnp.pad(b2, ((0, 0), (0, Op - O)))

    scale = jnp.asarray([wscale], dtype=jnp.float32)

    grid = (Mp // tm, Op // tn, Fp // tk)

    # Double-buffered VMEM footprint (x, W^T, bias, output); budget the scoped
    # VMEM limit against it but never above the v7x 64 MiB physical ceiling.
    buf_bytes = 2 * (tm * tk * x_isz + tk * tn * w_isz + tn * 4 + tm * tn * 4)
    vmem_limit = int(min(max(int(buf_bytes * 1.5), 32 << 20), 64 << 20))

    # Truthful traffic estimate: x is re-read Op/tn times, W re-read Mp/tm times.
    cost = pl.CostEstimate(
        flops=2 * Mp * Fp * Op,
        transcendentals=0,
        bytes_accessed=(Mp * Fp * x_isz * (Op // tn)
                        + Fp * Op * w_isz * (Mp // tm)
                        + Mp * Op * 4 + Op * 4),
    )

    kernel = functools.partial(eqlr_matmul_kernel, compute_dtype=compute_dtype)

    out = pl.pallas_call(
        kernel,
        out_shape=jax.ShapeDtypeStruct((Mp, Op), jnp.float32),
        grid=grid,
        in_specs=[
            pl.BlockSpec(memory_space=pltpu.MemorySpace.SMEM),    # wscale scalar
            pl.BlockSpec((tm, tk), lambda i, j, k: (i, k)),       # x tile
            pl.BlockSpec((tk, tn), lambda i, j, k: (k, j)),       # W^T tile
            pl.BlockSpec((1, tn), lambda i, j, k: (0, j)),        # bias tile
        ],
        out_specs=pl.BlockSpec((tm, tn), lambda i, j, k: (i, j)),
        compiler_params=pltpu.CompilerParams(
            dimension_semantics=("parallel", "parallel", "arbitrary"),
            vmem_limit_bytes=vmem_limit),
        cost_estimate=cost,
    )(scale, xf, w_t, b2)

    return out[:M, :O].reshape(B, T, O)


def init_equalized_lr_params(key, in_features, out_features):
    """Deterministic re-creation of EqualizedLR.__init__ on nn.Linear(in, out)."""
    # kaiming_normal_ with nonlinearity='relu', fan_in mode:
    #   std = gain / sqrt(fan_in), gain = sqrt(2)
    std = math.sqrt(2.0) / math.sqrt(in_features)
    w = jax.random.normal(key, (out_features, in_features), dtype=jnp.float32) * std
    wscale = jnp.sqrt(jnp.mean(w ** 2))                     # scalar
    w = w / wscale                                          # layer.weight /= wscale
    b = jnp.zeros((out_features,), dtype=jnp.float32)       # bias.fill_(0)
    return w, b, wscale


def _reference(x, w, b, wscale):
    # Pure-JAX reference of the torch forward: layer(x * wscale)
    return (x * wscale) @ w.T + b


if __name__ == "__main__":
    key = jax.random.PRNGKey(0)
    k_w, k_x, k_w2, k_x2, k_w3, k_x3, k_w4, k_x4 = jax.random.split(key, 8)

    # --- Test 1: module's example shape (torch.randn(1, 16, 128), Linear(128,128)).
    #             Small-weight fast path; single-tile grid; f32 torch-exact.
    B, T, F, O = 1, 16, 128, 128
    w, b, wscale = init_equalized_lr_params(k_w, F, O)       # w: (O, F) like torch
    x = jax.random.normal(k_x, (B, T, F), dtype=jnp.float32)
    y = jax.block_until_ready(equalized_lr_linear(x, w.T, b, wscale))
    y_ref = _reference(x, w, b, wscale)
    assert y.shape == (B, T, O)
    assert jnp.allclose(y, y_ref, atol=1e-4, rtol=1e-4)

    # --- Test 2: multi-tile grid with K accumulation into o_ref (force the
    #             non-resident-weight path with tiny tile caps), f32.
    B2, T2, F2, O2 = 2, 32, 256, 256
    w2, b2, wscale2 = init_equalized_lr_params(k_w2, F2, O2)
    x2 = jax.random.normal(k_x2, (B2, T2, F2), dtype=jnp.float32)
    y2 = jax.block_until_ready(
        equalized_lr_linear(x2, w2.T, b2, wscale2,
                            tm_cap=32, tn_cap=128, tk_cap=128,
                            weight_resident_bytes=0))
    y2_ref = _reference(x2, w2, b2, wscale2)
    assert y2.shape == (B2, T2, O2)
    assert jnp.allclose(y2, y2_ref, atol=1e-4, rtol=1e-4)

    # --- Test 3: non-128-aligned F/O to exercise the zero-pad path, f32.
    B3, T3, F3, O3 = 1, 8, 100, 72
    w3, b3, wscale3 = init_equalized_lr_params(k_w3, F3, O3)
    x3 = jax.random.normal(k_x3, (B3, T3, F3), dtype=jnp.float32)
    y3 = jax.block_until_ready(equalized_lr_linear(x3, w3.T, b3, wscale3))
    y3_ref = _reference(x3, w3, b3, wscale3)
    assert y3.shape == (B3, T3, O3)
    assert jnp.allclose(y3, y3_ref, atol=1e-4, rtol=1e-4)

    # --- Test 4: bf16 MXU feed (in-kernel x cast, pre-cast W), f32 accumulation.
    B4, T4, F4, O4 = 2, 64, 256, 512
    w4, b4, wscale4 = init_equalized_lr_params(k_w4, F4, O4)
    x4 = jax.random.normal(k_x4, (B4, T4, F4), dtype=jnp.float32)
    y4 = jax.block_until_ready(
        equalized_lr_linear(x4, w4.T, b4, wscale4,
                            tm_cap=64, tn_cap=256, tk_cap=128,
                            weight_resident_bytes=0,
                            compute_dtype=jnp.bfloat16))
    y4_ref = _reference(x4, w4, b4, wscale4)
    assert y4.shape == (B4, T4, O4)
    assert jnp.allclose(y4, y4_ref, atol=5e-2, rtol=5e-2)

    # TODO(synk): EqualizedLR's training-time gradient scaling (keeping W and
    # wscale separate for the optimizer) is a parameterization concern, not a
    # forward-pass op; only the forward is implemented here.

    print("KERNEL_OK")
</pallas_src>

<mosaic_0001>
module attributes {stable_mosaic.version = 11 : i64} {
  func.func @eqlr_matmul_kernel(%arg0: i32, %arg1: i32, %arg2: i32, %arg3: memref<1xf32, #tpu.memory_space<smem>>, %arg4: memref<16x128xf32, #tpu.memory_space<vmem>>, %arg5: memref<128x128xf32, #tpu.memory_space<vmem>>, %arg6: memref<1x128xf32, #tpu.memory_space<vmem>>, %arg7: memref<16x128xf32, #tpu.memory_space<vmem>>) attributes {dimension_semantics = [#tpu.dimension_semantics<parallel>, #tpu.dimension_semantics<parallel>, #tpu.dimension_semantics<arbitrary>], iteration_bounds = array<i64: 1, 1, 1>, scalar_prefetch = 0 : i64, scratch_operands = 0 : i64, tpu.core_type = #tpu.core_type<tc>, window_params = [{transform_indices = @transform_0, window_bounds = array<i64: 1>}, {transform_indices = @transform_1, window_bounds = array<i64: 16, 128>}, {transform_indices = @transform_2, window_bounds = array<i64: 128, 128>}, {transform_indices = @transform_3, window_bounds = array<i64: 1, 128>}, {transform_indices = @transform_4, window_bounds = array<i64: 16, 128>}]} {
    %c0_i32 = arith.constant 0 : i32
    %0 = arith.cmpi eq, %arg2, %c0_i32 : i32
    %1 = arith.extui %0 : i1 to i32
    %c0_i32_0 = arith.constant 0 : i32
    %2 = arith.cmpi ne, %1, %c0_i32_0 : i32
    scf.if %2 {
      %cst_10 = arith.constant 0.000000e+00 : f32
      %12 = vector.broadcast %cst_10 : f32 to vector<16x128xf32>
      %c0_11 = arith.constant 0 : index
      %c0_12 = arith.constant 0 : index
      %13 = vector.load %arg7[%c0_11, %c0_12] : memref<16x128xf32, #tpu.memory_space<vmem>>, vector<16x128xf32>
      tpu.vector_store %arg7[%c0_11, %c0_12], %12 {strides = array<i32>} : memref<16x128xf32, #tpu.memory_space<vmem>>, vector<16x128xf32>,
    } else {
    }
    %c0 = arith.constant 0 : index
    %c0_1 = arith.constant 0 : index
    %3 = vector.load %arg4[%c0, %c0_1] : memref<16x128xf32, #tpu.memory_space<vmem>>, vector<16x128xf32>
    %c0_2 = arith.constant 0 : index
    %c0_3 = arith.constant 0 : index
    %4 = vector.load %arg7[%c0_2, %c0_3] : memref<16x128xf32, #tpu.memory_space<vmem>>, vector<16x128xf32>
    %c0_4 = arith.constant 0 : index
    %c0_5 = arith.constant 0 : index
    %5 = vector.load %arg5[%c0_4, %c0_5] : memref<128x128xf32, #tpu.memory_space<vmem>>, vector<128x128xf32>
    %cst = arith.constant dense<0.000000e+00> : vector<16x128xf32>
    %6 = tpu.matmul %3, %5, %cst {dimension_numbers = #tpu.dot_dimension_numbers<[1], [0], [0], [1], [0, 0, 1, 1], [], []>} : vector<16x128xf32>, vector<128x128xf32>, vector<16x128xf32> -> vector<16x128xf32>
    %7 = arith.addf %4, %6 : vector<16x128xf32>
    %c0_6 = arith.constant 0 : index
    %c0_7 = arith.constant 0 : index
    %8 = vector.load %arg7[%c0_6, %c0_7] : memref<16x128xf32, #tpu.memory_space<vmem>>, vector<16x128xf32>
    tpu.vector_store %arg7[%c0_6, %c0_7], %7 {strides = array<i32>} : memref<16x128xf32, #tpu.memory_space<vmem>>, vector<16x128xf32>,
    %c0_i32_8 = arith.constant 0 : i32
    %9 = arith.cmpi eq, %arg2, %c0_i32_8 : i32
    %10 = arith.extui %9 : i1 to i32
    %c0_i32_9 = arith.constant 0 : i32
    %11 = arith.cmpi ne, %10, %c0_i32_9 : i32
    scf.if %11 {
      %c0_10 = arith.constant 0 : index
      %c0_11 = arith.constant 0 : index
      %12 = vector.load %arg7[%c0_10, %c0_11] : memref<16x128xf32, #tpu.memory_space<vmem>>, vector<16x128xf32>
      %c0_12 = arith.constant 0 : index
      %13 = memref.load %arg3[%c0_12] : memref<1xf32, #tpu.memory_space<smem>>
      %14 = vector.broadcast %13 : f32 to vector<16x128xf32>
      %15 = arith.mulf %12, %14 : vector<16x128xf32>
      %c0_13 = arith.constant 0 : index
      %c0_14 = arith.constant 0 : index
      %16 = vector.load %arg6[%c0_13, %c0_14] : memref<1x128xf32, #tpu.memory_space<vmem>>, vector<1x128xf32>
      %17 = vector.broadcast %16 : vector<1x128xf32> to vector<16x128xf32>
      %18 = arith.addf %15, %17 : vector<16x128xf32>
      %c0_15 = arith.constant 0 : index
      %c0_16 = arith.constant 0 : index
      %19 = vector.load %arg7[%c0_15, %c0_16] : memref<16x128xf32, #tpu.memory_space<vmem>>, vector<16x128xf32>
      tpu.vector_store %arg7[%c0_15, %c0_16], %18 {strides = array<i32>} : memref<16x128xf32, #tpu.memory_space<vmem>>, vector<16x128xf32>,
    } else {
    }
    return
  }
  func.func @transform_0(%arg0: i32, %arg1: i32, %arg2: i32) -> i32 {
    %c0_i32 = arith.constant 0 : i32
    %c0_i32_0 = arith.constant 0 : i32
    return %c0_i32 : i32
  }
  func.func @transform_1(%arg0: i32, %arg1: i32, %arg2: i32) -> (i32, i32) {
    %c0_i32 = arith.constant 0 : i32
    return %arg0, %arg2 : i32, i32
  }
  func.func @transform_2(%arg0: i32, %arg1: i32, %arg2: i32) -> (i32, i32) {
    %c0_i32 = arith.constant 0 : i32
    return %arg2, %arg1 : i32, i32
  }
  func.func @transform_3(%arg0: i32, %arg1: i32, %arg2: i32) -> (i32, i32) {
    %c0_i32 = arith.constant 0 : i32
    %c0_i32_0 = arith.constant 0 : i32
    return %c0_i32, %arg1 : i32, i32
  }
  func.func @transform_4(%arg0: i32, %arg1: i32, %arg2: i32) -> (i32, i32) {
    %c0_i32 = arith.constant 0 : i32
    return %arg0, %arg1 : i32, i32
  }
}

</mosaic_0001>

<llo_original>
// kernel: tpu_custom_call.1
$region0: #{tpu_custom_call.1}
  #allocation0 [shape = 'u32[]', space=smem, size = 0x4, offset = 0x4, fixed_abs, tag = 'smem constant byte address 0x4 - core index']
  #allocation1 [shape = 'u32[72,128]{1,0:T(1,128)}', space=vmem, size = 0x9000, scoped, tag = 'internal scratch']
  #allocation2 [shape = 'f32[1]{0:T(128)S(6)}', space=smem, size = 0x200, scoped, tag = 'scoped memory for tpu_custom_call.1']
  %s0 = inlined_call_operand.<no memory space> [shape: f32[1], index: 0, kind: input, shape index: {}]
  %s1 = inlined_call_operand.hbm [shape: f32[16,128], index: 1, kind: input, shape index: {}]
  %s2 = inlined_call_operand.hbm [shape: f32[128,128], index: 2, kind: input, shape index: {}]
  %s3 = inlined_call_operand.vmem [shape: f32[1,128], index: 3, kind: input, shape index: {}]
  %s4 = inlined_call_operand.hbm [shape: f32[16,128], index: 4, kind: output, shape index: {}]
  %s5 = sld [smem:[#allocation0]]
  $region42: #{tpu_custom_call.1} parent=0
    _
  %s7 = ssub.s32 1, %s5
  %s8 = scalar_select 0, %s7, %s5
  %9 = sst [smem:[#allocation2]] %s0
  $region1: #{tpu_custom_call.1} parent=0
    #allocation3 [shape = 'u8[8192]{0}', space=vmem, size = 0x2000, scoped, tag = 'input window, operand 1, single buffered']
    #allocation4 [shape = 's32[1]{0}', space=sflag, size = 0x4, scoped, tag = 'scoped memory for tpu_custom_call.1']
    #allocation5 [shape = 's32[1]{0}', space=sflag, size = 0x4, scoped, tag = 'scoped memory for tpu_custom_call.1']
    #allocation6 [shape = 'u8[65536]{0}', space=vmem, size = 0x10000, scoped, tag = 'input window, operand 2, single buffered']
    #allocation7 [shape = 's32[1]{0}', space=sflag, size = 0x4, scoped, tag = 'scoped memory for tpu_custom_call.1']
    #allocation8 [shape = 'u8[8192]{0}', space=vmem, size = 0x2000, scoped, tag = 'output window, operand 0, single buffered']
    %10 = vsyncpa [#allocation4], 0
    %11 = vsyncpa [#allocation7], 0
    %12 = vsyncpa [#allocation5], 0
    // Predicated region
    $region2: #{tpu_custom_call.1} parent=1 // pred_check
      _
    $region3: #{tpu_custom_call.1} parent=1 // pred_check_branch
      %14 = sbr.rel (0) target = $region5
    $region4: #{tpu_custom_call.1} parent=1 // pred_region
      _
    $region5: #{tpu_custom_call.1} parent=1 // pred_fallthru
      _
    // Predicated region
    $region6: #{tpu_custom_call.1} parent=1 // pred_check
      _
    $region7: #{tpu_custom_call.1} parent=1 // pred_check_branch
      %16 = sbr.rel (0) target = $region9
    $region8: #{tpu_custom_call.1} parent=1 // pred_region
      %18 = vsyncadd [#allocation4], 0
      %s19 = sshll.u32 %s1, 4
      %s20 = int_to_ptr.hbm [resolvable:$true] %s19
      %s21 = sshll.u32 [#allocation3], 4
      %s22 = int_to_ptr.vmem [resolvable:$true] %s21
      %27 = dma.hbm_to_vmem [thread:$0]  %s20, 256, %s22, [#allocation4], 128, 128, 8
    $region9: #{tpu_custom_call.1} parent=1 // pred_fallthru
      _
    // Predicated region
    $region10: #{tpu_custom_call.1} parent=1 // pred_check
      _
    $region11: #{tpu_custom_call.1} parent=1 // pred_check_branch
      %29 = sbr.rel (0) target = $region13
    $region12: #{tpu_custom_call.1} parent=1 // pred_region
      %31 = vsyncadd [#allocation7], 0
      %s32 = sshll.u32 %s2, 4
      %s33 = int_to_ptr.hbm [resolvable:$true] %s32
      %s34 = sshll.u32 [#allocation6], 4
      %s35 = int_to_ptr.vmem [resolvable:$true] %s34
      %40 = dma.hbm_to_vmem [thread:$0]  %s33, 2048, %s35, [#allocation7], 128, 128, 8
    $region13: #{tpu_custom_call.1} parent=1 // pred_fallthru
      _
    // Predicated region
    $region14: #{tpu_custom_call.1} parent=1 // pred_check
      _
    $region15: #{tpu_custom_call.1} parent=1 // pred_check_branch
      %42 = sbr.rel (0) target = $region17
    $region16: #{tpu_custom_call.1} parent=1 // pred_region
      _
    $region17: #{tpu_custom_call.1} parent=1 // pred_fallthru
      _
    // Predicated region
    $region18: #{tpu_custom_call.1} parent=1 // pred_check
      _
    $region19: #{tpu_custom_call.1} parent=1 // pred_check_branch
      %44 = sbr.rel (0) target = $region21
    $region20: #{tpu_custom_call.1} parent=1 // pred_region
      %46 = dma.done [#allocation4], 256
    $region21: #{tpu_custom_call.1} parent=1 // pred_fallthru
      _
    // Predicated region
    $region22: #{tpu_custom_call.1} parent=1 // pred_check
      _
    $region23: #{tpu_custom_call.1} parent=1 // pred_check_branch
      %48 = sbr.rel (0) target = $region25
    $region24: #{tpu_custom_call.1} parent=1 // pred_region
      %50 = dma.done [#allocation7], 2048
    $region25: #{tpu_custom_call.1} parent=1 // pred_fallthru
      _
    %p51 = scmp.eq.s32.totalorder 0, 0
    // Predicated region
    $region26: #{tpu_custom_call.1} parent=1 // pred_check
      %p52 = pneg %p51
    $region27: #{tpu_custom_call.1} parent=1 // pred_check_branch
      %54 = sbr.rel (%p52) target = $region29
    $region28: #{tpu_custom_call.1} parent=1 // pred_region
      %55 = vst [vmem:[#allocation8] sm:$0xff] 0.0
      %56 = vst [vmem:[#allocation8 + $0x8] sm:$0xff] 0.0
    $region29: #{tpu_custom_call.1} parent=1 // pred_fallthru
      _
    %v57 = vld [vmem:[#allocation3] sm:$0xff]
    %v58 = vld [vmem:[#allocation3 + $0x8] sm:$0xff]
    %v59 = vld [vmem:[#allocation8] sm:$0xff]
    %v60 = vld [vmem:[#allocation8 + $0x8] sm:$0xff]
    %v61 = vld [vmem:[#allocation6] sm:$0xff]
    %v62 = vld [vmem:[#allocation6 + $0x8] sm:$0xff]
    %v63 = vld [vmem:[#allocation6 + $0x10] sm:$0xff]
    %v64 = vld [vmem:[#allocation6 + $0x18] sm:$0xff]
    %v65 = vld [vmem:[#allocation6 + $0x20] sm:$0xff]
    %v66 = vld [vmem:[#allocation6 + $0x28] sm:$0xff]
    %v67 = vld [vmem:[#allocation6 + $0x30] sm:$0xff]
    %v68 = vld [vmem:[#allocation6 + $0x38] sm:$0xff]
    %v69 = vld [vmem:[#allocation6 + $0x40] sm:$0xff]
    %v70 = vld [vmem:[#allocation6 + $0x48] sm:$0xff]
    %v71 = vld [vmem:[#allocation6 + $0x50] sm:$0xff]
    %v72 = vld [vmem:[#allocation6 + $0x58] sm:$0xff]
    %v73 = vld [vmem:[#allocation6 + $0x60] sm:$0xff]
    %v74 = vld [vmem:[#allocation6 + $0x68] sm:$0xff]
    %v75 = vld [vmem:[#allocation6 + $0x70] sm:$0xff]
    %v76 = vld [vmem:[#allocation6 + $0x78] sm:$0xff]
    %77 = vmatpush.msra.mxu0 %v76
    %78 = vmatpush.msra.mxu0 %v75
    %79 = vmatpush.msra.mxu0 %v74
    %80 = vmatpush.msra.mxu0 %v73
    %81 = vmatpush.msra.mxu0 %v72
    %82 = vmatpush.msra.mxu0 %v71
    %83 = vmatpush.msra.mxu0 %v70
    %84 = vmatpush.msra.mxu0 %v69
    %85 = vmatpush.msra.mxu0 %v68
    %86 = vmatpush.msra.mxu0 %v67
    %87 = vmatpush.msra.mxu0 %v66
    %88 = vmatpush.msra.mxu0 %v65
    %89 = vmatpush.msra.mxu0 %v64
    %90 = vmatpush.msra.mxu0 %v63
    %91 = vmatpush.msra.mxu0 %v62
    %92 = vmatpush.msra.mxu0 %v61
    %93 = vmatmul.f32.gmra.mxu0 %v57
    %v94 = vpop.f32.mrf.mxu0
    %v95 = vadd.f32 0.0, %v94
    %96 = vmatmul.f32.gmra.mxu0 %v58
    %v97 = vpop.f32.mrf.mxu0
    %v98 = vadd.f32 0.0, %v97
    %99 = vdwg.mxu0
    %v100 = vadd.f32 %v59, %v95
    %v101 = vadd.f32 %v60, %v98
    %102 = vst [vmem:[#allocation8] sm:$0xff] %v100
    %103 = vst [vmem:[#allocation8 + $0x8] sm:$0xff] %v101
    // Predicated region
    $region30: #{tpu_custom_call.1} parent=1 // pred_check
      %p104 = pneg %p51
    $region31: #{tpu_custom_call.1} parent=1 // pred_check_branch
      %106 = sbr.rel (%p104) target = $region33
    $region32: #{tpu_custom_call.1} parent=1 // pred_region
      %v107 = vld [vmem:[#allocation8] sm:$0xff]
      %v108 = vld [vmem:[#allocation8 + $0x8] sm:$0xff]
      %s109 = sld [smem:[#allocation2]]
      %v110 = vstv %s109
      %v111 = vmul.f32 %v107, %v110
      %v112 = vmul.f32 %v108, %v110
      %v113 = vld [vmem:[%s3] sm:$0x1]
      %v115 = vperm.slane %v113, 0
      %v117 = vadd.f32 %v111, %v115
      %v118 = vadd.f32 %v112, %v115
      %119 = vst [vmem:[#allocation8] sm:$0xff] %v117
      %120 = vst [vmem:[#allocation8 + $0x8] sm:$0xff] %v118
    $region33: #{tpu_custom_call.1} parent=1 // pred_fallthru
      _
    // Predicated region
    $region34: #{tpu_custom_call.1} parent=1 // pred_check
      _
    $region35: #{tpu_custom_call.1} parent=1 // pred_check_branch
      %122 = sbr.rel (0) target = $region37
    $region36: #{tpu_custom_call.1} parent=1 // pred_region
      %124 = vsyncadd [#allocation5], 0
      %s125 = sshll.u32 [#allocation8], 4
      %s126 = int_to_ptr.vmem [resolvable:$true] %s125
      %s127 = sshll.u32 %s4, 4
      %s128 = int_to_ptr.hbm [resolvable:$true] %s127
      %133 = dma.vmem_to_hbm [thread:$0]  %s126, 256, %s128, [#allocation5], 128, 128, 8
    $region37: #{tpu_custom_call.1} parent=1 // pred_fallthru
      _
    // Predicated region
    $region38: #{tpu_custom_call.1} parent=1 // pred_check
      _
    $region39: #{tpu_custom_call.1} parent=1 // pred_check_branch
      %135 = sbr.rel (0) target = $region41
    $region40: #{tpu_custom_call.1} parent=1 // pred_region
      %137 = dma.done [#allocation5], 256
    $region41: #{tpu_custom_call.1} parent=1 // pred_fallthru
      _
    %138 = vsyncpa [#allocation4], 1
    %139 = vsyncpa [#allocation7], 1
    %140 = vsyncpa [#allocation5], 1

</llo_original>
